<compile_context>
chip_gen: v7x
topology: tpu7x:2x2x1
jax: 0.10.0
libtpu: 0.0.40
codegen_flags: <defaults>
</compile_context>

<pallas_src>
import math
import numpy as np
import jax
import jax.numpy as jnp
from jax.experimental import pallas as pl
from jax.experimental.pallas import tpu as pltpu


def rgcn_layer_kernel(h_ref, hpost_ref, w_ref, b_ref, o_ref):
    # Self-loop message on the MXU: bf16 x bf16 -> f32 accumulate.
    loop_msg = jnp.dot(h_ref[...], w_ref[...], preferred_element_type=jnp.float32)
    node_repr = hpost_ref[...].astype(jnp.float32) + b_ref[...] + loop_msg
    # TODO(synk): RGCNLayer.forward references self.bn, which is never defined in
    #             RGCNLayer.__init__ (AttributeError in the base class) — skipped.
    node_repr = jnp.maximum(node_repr, 0.0)  # activation = ReLU
    # TODO(synk): nn.Dropout is identity in eval mode; stochastic masking omitted.
    o_ref[...] = node_repr.astype(o_ref.dtype)


def _round_up(x, m):
    return ((x + m - 1) // m) * m


_ROW_ALIGN = 16              # folded-row (sublane) alignment, valid for bf16 and f32
_STREAM_BUDGET = 12 << 20    # double-buffered stream VMEM budget per grid step
_MAX_TILE_ROWS = 4096        # folded rows per step
_VMEM_LIMIT = 32 << 20       # raises v5e's 16 MiB scoped default; fits v7x's 64 MiB VMEM


def rgcn_layer_forward(h_pre, h_post, loop_weight, bias_weight, *,
                       compute_dtype=jnp.bfloat16):
    """h_pre: (N, in_feat) node features before propagate.
       h_post: (N, out_feat) node features written by propagate (abstract in base class).
       loop_weight: (in_feat, out_feat), bias_weight: (out_feat,)."""
    N, in_feat = h_pre.shape
    out_feat = loop_weight.shape[1]
    assert h_post.shape == (N, out_feat)
    in_bytes = jnp.dtype(compute_dtype).itemsize

    # --- lane-dense folding factor: pack `fold` node rows into the 128-lane dim ---
    fold = 128 // out_feat if (out_feat < 128 and 128 % out_feat == 0) else 1
    in_f, out_f = fold * in_feat, fold * out_feat

    # --- tile selection (folded rows per grid step) from a VMEM budget ---
    R = -(-N // fold)                                            # folded rows of real data
    per_row = 2 * (in_f * in_bytes + out_f * in_bytes + out_f * 4)   # double-buffered streams
    resident = 2 * (in_f * out_f * in_bytes) + 2 * (out_f * 4)       # weight + bias buffers
    budget = max(_ROW_ALIGN * per_row, _STREAM_BUDGET - resident)
    tile_r = min((budget // per_row) // _ROW_ALIGN * _ROW_ALIGN, _MAX_TILE_ROWS)
    tile_r = max(tile_r, _ROW_ALIGN)
    if R > _ROW_ALIGN:
        # Keep >= 2 grid steps when the data allows it (v7x megacore sharding).
        tile_r = min(tile_r, _round_up(-(-R // 2), _ROW_ALIGN))
    else:
        tile_r = _ROW_ALIGN
    R_pad = _round_up(R, tile_r)
    N_pad = R_pad * fold
    grid = (R_pad // tile_r,)

    # --- wrapper-side layout plumbing (row-major reshapes, free in HBM) ---
    hp = jnp.pad(h_pre.astype(compute_dtype), ((0, N_pad - N), (0, 0))).reshape(R_pad, in_f)
    hq = jnp.pad(h_post.astype(compute_dtype), ((0, N_pad - N), (0, 0))).reshape(R_pad, out_f)
    # Block-diagonal weight kron(I_fold, W): folded matmul == per-node-row h @ W,
    # so the kernel needs no in-kernel reshape and the MXU sees a 128-wide operand.
    w_bd = jnp.kron(jnp.eye(fold, dtype=jnp.float32),
                    loop_weight.astype(jnp.float32)).astype(compute_dtype)
    b_f = jnp.tile(bias_weight.astype(jnp.float32), fold).reshape(1, out_f)

    out = pl.pallas_call(
        rgcn_layer_kernel,
        out_shape=jax.ShapeDtypeStruct((R_pad, out_f), jnp.float32),
        grid_spec=pltpu.PrefetchScalarGridSpec(
            num_scalar_prefetch=0,
            grid=grid,
            in_specs=[
                pl.BlockSpec((tile_r, in_f), lambda i: (i, 0)),    # h_pre  (bf16, lane-dense)
                pl.BlockSpec((tile_r, out_f), lambda i: (i, 0)),   # h_post (bf16, lane-dense)
                pl.BlockSpec((in_f, out_f), lambda i: (0, 0)),     # block-diag loop_weight (resident)
                pl.BlockSpec((1, out_f), lambda i: (0, 0)),        # bias (resident)
            ],
            out_specs=pl.BlockSpec((tile_r, out_f), lambda i: (i, 0)),
        ),
        compiler_params=pltpu.CompilerParams(
            dimension_semantics=("parallel",),
            vmem_limit_bytes=_VMEM_LIMIT,
        ),
    )(hp, hq, w_bd, b_f)

    # Unfold lanes back to node rows and drop the padding.
    return out.reshape(N_pad, out_feat)[:N]


def ref_forward(h_pre, h_post, loop_weight, bias_weight, compute_dtype=jnp.bfloat16):
    hp = h_pre.astype(compute_dtype).astype(jnp.float32)
    hq = h_post.astype(compute_dtype).astype(jnp.float32)
    w = loop_weight.astype(compute_dtype).astype(jnp.float32)
    out = hq + bias_weight.astype(jnp.float32)[None, :] + hp @ w
    return jnp.maximum(out, 0.0)


if __name__ == "__main__":
    # Small, deterministic problem. N deliberately NOT a multiple of the tile to
    # exercise the padding / tail handling path.
    N, in_feat, out_feat = 200, 32, 32
    key = jax.random.PRNGKey(0)
    k1, k2, k3, k4 = jax.random.split(key, 4)

    # Node features before propagate.
    h_pre = jax.random.normal(k1, (N, in_feat), dtype=jnp.float32)
    # TODO(synk): propagate() is abstract (raises NotImplementedError in the base
    #             class); the post-propagate node features are supplied as an input.
    h_post = jax.random.normal(k2, (N, out_feat), dtype=jnp.float32)

    # loop_weight: xavier_uniform_ with gain = calculate_gain('relu') = sqrt(2).
    gain = math.sqrt(2.0)
    bound = gain * math.sqrt(6.0 / (in_feat + out_feat))
    loop_weight = jax.random.uniform(
        k3, (in_feat, out_feat), minval=-bound, maxval=bound, dtype=jnp.float32)

    # bias_weight: uniform(-stdv, stdv), stdv = 1/sqrt(out_feat).
    stdv = 1.0 / math.sqrt(out_feat)
    bias_weight = jax.random.uniform(
        k4, (out_feat,), minval=-stdv, maxval=stdv, dtype=jnp.float32)

    out = rgcn_layer_forward(h_pre, h_post, loop_weight, bias_weight)
    out = jax.block_until_ready(out)

    expected = ref_forward(h_pre, h_post, loop_weight, bias_weight)
    np.testing.assert_allclose(np.asarray(out), np.asarray(expected),
                               rtol=2e-3, atol=2e-3)
    print("KERNEL_OK")
</pallas_src>

<mosaic_0001>
module attributes {stable_mosaic.version = 11 : i64} {
  func.func @rgcn_layer_kernel(%arg0: i32, %arg1: memref<32x128xbf16, #tpu.memory_space<vmem>>, %arg2: memref<32x128xbf16, #tpu.memory_space<vmem>>, %arg3: memref<128x128xbf16, #tpu.memory_space<vmem>>, %arg4: memref<1x128xf32, #tpu.memory_space<vmem>>, %arg5: memref<32x128xf32, #tpu.memory_space<vmem>>) attributes {dimension_semantics = [#tpu.dimension_semantics<parallel>], iteration_bounds = array<i64: 2>, scalar_prefetch = 0 : i64, scratch_operands = 0 : i64, tpu.core_type = #tpu.core_type<tc>, window_params = [{transform_indices = @transform_0, window_bounds = array<i64: 32, 128>}, {transform_indices = @transform_1, window_bounds = array<i64: 32, 128>}, {pipeline_mode = #tpu.pipeline_mode<synchronous>, transform_indices = @transform_2, window_bounds = array<i64: 128, 128>}, {pipeline_mode = #tpu.pipeline_mode<synchronous>, transform_indices = @transform_3, window_bounds = array<i64: 1, 128>}, {transform_indices = @transform_4, window_bounds = array<i64: 32, 128>}]} {
    %c0 = arith.constant 0 : index
    %c0_0 = arith.constant 0 : index
    %0 = vector.load %arg1[%c0, %c0_0] : memref<32x128xbf16, #tpu.memory_space<vmem>>, vector<32x128xbf16>
    %c0_1 = arith.constant 0 : index
    %c0_2 = arith.constant 0 : index
    %1 = vector.load %arg3[%c0_1, %c0_2] : memref<128x128xbf16, #tpu.memory_space<vmem>>, vector<128x128xbf16>
    %cst = arith.constant dense<0.000000e+00> : vector<32x128xf32>
    %2 = tpu.matmul %0, %1, %cst {dimension_numbers = #tpu.dot_dimension_numbers<[1], [0], [0], [1], [0, 0, 1, 1], [], []>} : vector<32x128xbf16>, vector<128x128xbf16>, vector<32x128xf32> -> vector<32x128xf32>
    %c0_3 = arith.constant 0 : index
    %c0_4 = arith.constant 0 : index
    %3 = vector.load %arg2[%c0_3, %c0_4] : memref<32x128xbf16, #tpu.memory_space<vmem>>, vector<32x128xbf16>
    %4 = arith.extf %3 : vector<32x128xbf16> to vector<32x128xf32>
    %c0_5 = arith.constant 0 : index
    %c0_6 = arith.constant 0 : index
    %5 = vector.load %arg4[%c0_5, %c0_6] : memref<1x128xf32, #tpu.memory_space<vmem>>, vector<1x128xf32>
    %6 = vector.broadcast %5 : vector<1x128xf32> to vector<32x128xf32>
    %7 = arith.addf %4, %6 : vector<32x128xf32>
    %8 = arith.addf %7, %2 : vector<32x128xf32>
    %cst_7 = arith.constant 0.000000e+00 : f32
    %9 = vector.broadcast %cst_7 : f32 to vector<32x128xf32>
    %10 = arith.maximumf %8, %9 : vector<32x128xf32>
    %c0_8 = arith.constant 0 : index
    %c0_9 = arith.constant 0 : index
    %11 = vector.load %arg5[%c0_8, %c0_9] : memref<32x128xf32, #tpu.memory_space<vmem>>, vector<32x128xf32>
    tpu.vector_store %arg5[%c0_8, %c0_9], %10 {strides = array<i32>} : memref<32x128xf32, #tpu.memory_space<vmem>>, vector<32x128xf32>,
    return
  }
  func.func @transform_0(%arg0: i32) -> (i32, i32) {
    %c0_i32 = arith.constant 0 : i32
    %c0_i32_0 = arith.constant 0 : i32
    return %arg0, %c0_i32 : i32, i32
  }
  func.func @transform_1(%arg0: i32) -> (i32, i32) {
    %c0_i32 = arith.constant 0 : i32
    %c0_i32_0 = arith.constant 0 : i32
    return %arg0, %c0_i32 : i32, i32
  }
  func.func @transform_2(%arg0: i32) -> (i32, i32) {
    %c0_i32 = arith.constant 0 : i32
    %c0_i32_0 = arith.constant 0 : i32
    %c0_i32_1 = arith.constant 0 : i32
    return %c0_i32, %c0_i32_0 : i32, i32
  }
  func.func @transform_3(%arg0: i32) -> (i32, i32) {
    %c0_i32 = arith.constant 0 : i32
    %c0_i32_0 = arith.constant 0 : i32
    %c0_i32_1 = arith.constant 0 : i32
    return %c0_i32, %c0_i32_0 : i32, i32
  }
  func.func @transform_4(%arg0: i32) -> (i32, i32) {
    %c0_i32 = arith.constant 0 : i32
    %c0_i32_0 = arith.constant 0 : i32
    return %arg0, %c0_i32 : i32, i32
  }
}

</mosaic_0001>

<llo_original>
// kernel: tpu_custom_call.1
$region0: #{tpu_custom_call.1}
  #allocation0 [shape = 'u32[]', space=smem, size = 0x4, offset = 0x4, fixed_abs, tag = 'smem constant byte address 0x4 - core index']
  #allocation1 [shape = 'u32[144,128]{1,0:T(1,128)}', space=vmem, size = 0x12000, scoped, tag = 'internal scratch']
  %s0 = inlined_call_operand.hbm [shape: bf16[64,128], index: 0, kind: input, shape index: {}]
  %s1 = inlined_call_operand.hbm [shape: bf16[64,128], index: 1, kind: input, shape index: {}]
  %s2 = inlined_call_operand.hbm [shape: bf16[128,128], index: 2, kind: input, shape index: {}]
  %s3 = inlined_call_operand.vmem [shape: f32[1,128], index: 3, kind: input, shape index: {}]
  %s4 = inlined_call_operand.hbm [shape: f32[64,128], index: 4, kind: output, shape index: {}]
  %s5 = sld [smem:[#allocation0]]
  $region61: #{tpu_custom_call.1} parent=0
    _
  %s7 = ssub.s32 1, %s5
  %s8 = scalar_select 0, %s7, %s5
  $region1: #{tpu_custom_call.1} parent=0
    #allocation2 [shape = 'u8[16384]{0}', space=vmem, size = 0x4000, scoped, tag = 'input window, operand 0']
    #allocation3 [shape = 's32[2]{0}', space=sflag, size = 0x8, scoped, tag = 'scoped memory for tpu_custom_call.1']
    #allocation4 [shape = 's32[2]{0}', space=sflag, size = 0x8, scoped, tag = 'scoped memory for tpu_custom_call.1']
    #allocation5 [shape = 'u8[16384]{0}', space=vmem, size = 0x4000, scoped, tag = 'input window, operand 1']
    #allocation6 [shape = 's32[2]{0}', space=sflag, size = 0x8, scoped, tag = 'scoped memory for tpu_custom_call.1']
    #allocation7 [shape = 'u8[32768]{0}', space=vmem, size = 0x8000, scoped, tag = 'input window, operand 2, single buffered']
    #allocation8 [shape = 'u8[32768]{0}', space=vmem, size = 0x8000, scoped, tag = 'output window, operand 0']
    %9 = vsyncpa [#allocation3], 0
    %s10 = scalar_lea.sflag [#allocation3], 1
    %11 = vsyncpa %s10, 0
    %12 = vsyncpa [#allocation6], 0
    %s13 = scalar_lea.sflag [#allocation6], 1
    %14 = vsyncpa %s13, 0
    %15 = vsyncpa [#allocation4], 0
    %s16 = scalar_lea.sflag [#allocation4], 1
    %17 = vsyncpa %s16, 0
    loop: start=0, step=1, limit=4
    $region2: #{tpu_custom_call.1} parent=1 // loop_pre_header
      _
    $region3: #{tpu_custom_call.1} parent=1 // loop_header
      %s19 = sphi 0, %s23
      %p20 = scmp.ge.s32.totalorder %s19, 4
      %s29 = sphi 0, %s31
      %s32 = sphi 0, %s29
      %s33 = sphi 0, %s32
      %s49 = sphi 0, %s33
      %s55 = sphi 0, %s57
      %s58 = sphi 0, %s55
      %s59 = sphi 0, %s58
      %s75 = sphi 0, %s59
      %s79 = sphi 0, %s79
      %s81 = sphi 0, %s79
      %s82 = sphi 0, %s81
      %s96 = sphi 0, %s82
      %s100 = sphi 0, %s100
      %s102 = sphi 0, %s100
      %s103 = sphi 0, %s102
      %s117 = sphi 0, %s103
      %s123 = sphi 0, %s125
      %s126 = sphi 0, %s123
      %s127 = sphi 0, %s126
      %s143 = sphi 0, %s127
    $region4: #{tpu_custom_call.1} parent=1 // loop_header_branch
      %22 = sbr.rel (%p20) target = $region8
    $region5: #{tpu_custom_call.1} parent=1 // loop_body
      %s24 = ssub.s32 %s19, 1
      %s25 = ssub.s32 %s19, 2
      %s26 = sadd.s32 %s19, 1
      %s27 = ssub.s32 %s19, %s26
      %p28 = scmp.eq.s32.totalorder %s27, 0
      %s30 = sadd.s32 %s29, 1
      %s31 = scalar_select %p28, %s29, %s30
      %p34 = pneg %p28
      %p35 = scmp.eq.s32.totalorder %s19, 1
      %p36 = por %p34, %p35
      %p37 = scmp.ne.s32.totalorder %s29, %s32
      %p38 = scmp.eq.s32.totalorder %s19, 0
      %p39 = por %p37, %p38
      %p40 = scmp.ne.s32.totalorder %s29, %s32
      %p41 = scmp.eq.s32.totalorder %s24, 1
      %p42 = por %p40, %p41
      %p43 = scmp.ne.s32.totalorder %s32, %s33
      %p44 = scmp.eq.s32.totalorder %s24, 0
      %p45 = por %p43, %p44
      %p46 = scmp.ne.s32.totalorder %s32, %s33
      %p47 = scmp.eq.s32.totalorder %s25, 1
      %p48 = por %p46, %p47
      %p50 = scmp.ne.s32.totalorder %s33, %s49
      %p51 = scmp.eq.s32.totalorder %s25, 0
      %p52 = por %p50, %p51
      %s53 = ssub.s32 %s19, %s26
      %p54 = scmp.eq.s32.totalorder %s53, 0
      %s56 = sadd.s32 %s55, 1
      %s57 = scalar_select %p54, %s55, %s56
      %p60 = pneg %p54
      %p61 = scmp.eq.s32.totalorder %s19, 1
      %p62 = por %p60, %p61
      %p63 = scmp.ne.s32.totalorder %s55, %s58
      %p64 = scmp.eq.s32.totalorder %s19, 0
      %p65 = por %p63, %p64
      %p66 = scmp.ne.s32.totalorder %s55, %s58
      %p67 = scmp.eq.s32.totalorder %s24, 1
      %p68 = por %p66, %p67
      %p69 = scmp.ne.s32.totalorder %s58, %s59
      %p70 = scmp.eq.s32.totalorder %s24, 0
      %p71 = por %p69, %p70
      %p72 = scmp.ne.s32.totalorder %s58, %s59
      %p73 = scmp.eq.s32.totalorder %s25, 1
      %p74 = por %p72, %p73
      %p76 = scmp.ne.s32.totalorder %s59, %s75
      %p77 = scmp.eq.s32.totalorder %s25, 0
      %p78 = por %p76, %p77
      %s80 = sadd.s32 %s79, 1
      %p83 = scmp.eq.s32.totalorder %s19, 1
      %p84 = scmp.ne.s32.totalorder %s79, %s81
      %p85 = scmp.eq.s32.totalorder %s19, 0
      %p86 = por %p84, %p85
      %p87 = scmp.ne.s32.totalorder %s79, %s81
      %p88 = scmp.eq.s32.totalorder %s24, 1
      %p89 = por %p87, %p88
      %p90 = scmp.ne.s32.totalorder %s81, %s82
      %p91 = scmp.eq.s32.totalorder %s24, 0
      %p92 = por %p90, %p91
      %p93 = scmp.ne.s32.totalorder %s81, %s82
      %p94 = scmp.eq.s32.totalorder %s25, 1
      %p95 = por %p93, %p94
      %p97 = scmp.ne.s32.totalorder %s82, %s96
      %p98 = scmp.eq.s32.totalorder %s25, 0
      %p99 = por %p97, %p98
      %s101 = sadd.s32 %s100, 1
      %p104 = scmp.eq.s32.totalorder %s19, 1
      %p105 = scmp.ne.s32.totalorder %s100, %s102
      %p106 = scmp.eq.s32.totalorder %s19, 0
      %p107 = por %p105, %p106
      %p108 = scmp.ne.s32.totalorder %s100, %s102
      %p109 = scmp.eq.s32.totalorder %s24, 1
      %p110 = por %p108, %p109
      %p111 = scmp.ne.s32.totalorder %s102, %s103
      %p112 = scmp.eq.s32.totalorder %s24, 0
      %p113 = por %p111, %p112
      %p114 = scmp.ne.s32.totalorder %s102, %s103
      %p115 = scmp.eq.s32.totalorder %s25, 1
      %p116 = por %p114, %p115
      %p118 = scmp.ne.s32.totalorder %s103, %s117
      %p119 = scmp.eq.s32.totalorder %s25, 0
      %p120 = por %p118, %p119
      %s121 = ssub.s32 %s19, %s26
      %p122 = scmp.eq.s32.totalorder %s121, 0
      %s124 = sadd.s32 %s123, 1
      %s125 = scalar_select %p122, %s123, %s124
      %p128 = pneg %p122
      %p129 = scmp.eq.s32.totalorder %s19, 1
      %p130 = por %p128, %p129
      %p131 = scmp.ne.s32.totalorder %s123, %s126
      %p132 = scmp.eq.s32.totalorder %s19, 0
      %p133 = por %p131, %p132
      %p134 = scmp.ne.s32.totalorder %s123, %s126
      %p135 = scmp.eq.s32.totalorder %s24, 1
      %p136 = por %p134, %p135
      %p137 = scmp.ne.s32.totalorder %s126, %s127
      %p138 = scmp.eq.s32.totalorder %s24, 0
      %p139 = por %p137, %p138
      %p140 = scmp.ne.s32.totalorder %s126, %s127
      %p141 = scmp.eq.s32.totalorder %s25, 1
      %p142 = por %p140, %p141
      %p144 = scmp.ne.s32.totalorder %s127, %s143
      %p145 = scmp.eq.s32.totalorder %s25, 0
      %p146 = por %p144, %p145
      %p147 = scmp.le.s32.totalorder 1, %s19
      %p148 = scmp.lt.s32.totalorder %s19, 3
      %p149 = pnand %p147, %p148
      %p150 = pneg %p149
      // Predicated region
      $region9: #{tpu_custom_call.1} parent=5 // pred_check
        _
      $region10: #{tpu_custom_call.1} parent=5 // pred_check_branch
        %152 = sbr.rel (%p149) target = $region12
      $region11: #{tpu_custom_call.1} parent=5 // pred_region
        %s153 = ssub.s32 %s19, 1
        // Predicated region
        $region13: #{tpu_custom_call.1} parent=11 // pred_check
          %p154 = pneg %p92
        $region14: #{tpu_custom_call.1} parent=11 // pred_check_branch
          %156 = sbr.rel (%p154) target = $region16
        $region15: #{tpu_custom_call.1} parent=11 // pred_region
          %s158 = ssub.s32 1024, 1024
          %159 = vsyncadd [#allocation6], %s158
          %s160 = sshll.u32 [#allocation7], 4
          %s161 = int_to_ptr.vmem [resolvable:$true] %s160
          %166 = dma.hbm_to_vmem [thread:$0]  %s2, 1024, %s161, [#allocation6], 64, 64, 4
        $region16: #{tpu_custom_call.1} parent=11 // pred_fallthru
          _
        // Predicated region
        $region17: #{tpu_custom_call.1} parent=11 // pred_check
          %p167 = pneg %p113
        $region18: #{tpu_custom_call.1} parent=11 // pred_check_branch
          %169 = sbr.rel (%p167) target = $region20
        $region19: #{tpu_custom_call.1} parent=11 // pred_region
          _
        $region20: #{tpu_custom_call.1} parent=11 // pred_fallthru
          _
      $region12: #{tpu_custom_call.1} parent=5 // pred_fallthru
        _
      %p170 = scmp.lt.s32.totalorder %s19, 2
      // Predicated region
      $region21: #{tpu_custom_call.1} parent=5 // pred_check
        %p171 = pneg %p170
      $region22: #{tpu_custom_call.1} parent=5 // pred_check_branch
        %173 = sbr.rel (%p171) target = $region24
      $region23: #{tpu_custom_call.1} parent=5 // pred_region
        // Predicated region
        $region25: #{tpu_custom_call.1} parent=23 // pred_check
          %p174 = pneg %p39
        $region26: #{tpu_custom_call.1} parent=23 // pred_check_branch
          %176 = sbr.rel (%p174) target = $region28
        $region27: #{tpu_custom_call.1} parent=23 // pred_region
          %s177 = sand.u32 %s29, 1
          %s178 = scalar_lea.sflag [#allocation3], %s177
          %s179 = sand.u32 %s29, 1
          %s180 = smul.addr %s179, 16
          %s181 = scalar_lea.vmem [#allocation2], %s180
          %s182 = smul.u32 4, %s19
          %s184 = ssub.s32 256, 256
          %185 = vsyncadd %s178, %s184
          %s186 = smul.addr %s182, 64
          %s187 = scalar_lea.hbm %s0, %s186
          %s188 = sshll.u32 %s181, 4
          %s189 = int_to_ptr.vmem [resolvable:$true] %s188
          %194 = dma.hbm_to_vmem [thread:$0]  %s187, 256, %s189, %s178, 64, 64, 4
        $region28: #{tpu_custom_call.1} parent=23 // pred_fallthru
          _
        // Predicated region
        $region29: #{tpu_custom_call.1} parent=23 // pred_check
          %p195 = pneg %p65
        $region30: #{tpu_custom_call.1} parent=23 // pred_check_branch
          %197 = sbr.rel (%p195) target = $region32
        $region31: #{tpu_custom_call.1} parent=23 // pred_region
          %s198 = sand.u32 %s19, 1
          %s199 = scalar_lea.sflag [#allocation6], %s198
          %s200 = sand.u32 %s55, 1
          %s201 = smul.addr %s200, 16
          %s202 = scalar_lea.vmem [#allocation5], %s201
          %s203 = smul.u32 4, %s19
          %s205 = ssub.s32 256, 256
          %206 = vsyncadd %s199, %s205
          %s207 = smul.addr %s203, 64
          %s208 = scalar_lea.hbm %s1, %s207
          %s209 = sshll.u32 %s202, 4
          %s210 = int_to_ptr.vmem [resolvable:$true] %s209
          %215 = dma.hbm_to_vmem [thread:$0]  %s208, 256, %s210, %s199, 64, 64, 4
        $region32: #{tpu_custom_call.1} parent=23 // pred_fallthru
          _
      $region24: #{tpu_custom_call.1} parent=5 // pred_fallthru
        _
      %p216 = scmp.le.s32.totalorder 1, %s19
      %p217 = scmp.lt.s32.totalorder %s19, 3
      %p218 = pnand %p216, %p217
      %p219 = pneg %p218
      // Predicated region
      $region33: #{tpu_custom_call.1} parent=5 // pred_check
        _
      $region34: #{tpu_custom_call.1} parent=5 // pred_check_branch
        %221 = sbr.rel (%p218) target = $region36
      $region35: #{tpu_custom_call.1} parent=5 // pred_region
        %s222 = ssub.s32 %s19, 1
        %s223 = sand.u32 %s32, 1
        %s224 = scalar_lea.sflag [#allocation3], %s223
        %s225 = sand.u32 %s32, 1
        %s226 = smul.addr %s225, 16
        %s227 = scalar_lea.vmem [#allocation2], %s226
        // Predicated region
        $region37: #{tpu_custom_call.1} parent=35 // pred_check
          %p228 = pneg %p45
        $region38: #{tpu_custom_call.1} parent=35 // pred_check_branch
          %230 = sbr.rel (%p228) target = $region40
        $region39: #{tpu_custom_call.1} parent=35 // pred_region
          %231 = dma.done %s224, 256
        $region40: #{tpu_custom_call.1} parent=35 // pred_fallthru
          _
        %s232 = sand.u32 %s24, 1
        %s233 = scalar_lea.sflag [#allocation6], %s232
        %s234 = sand.u32 %s58, 1
        %s235 = smul.addr %s234, 16
        %s236 = scalar_lea.vmem [#allocation5], %s235
        // Predicated region
        $region41: #{tpu_custom_call.1} parent=35 // pred_check
          %p237 = pneg %p71
        $region42: #{tpu_custom_call.1} parent=35 // pred_check_branch
          %239 = sbr.rel (%p237) target = $region44
        $region43: #{tpu_custom_call.1} parent=35 // pred_region
          %240 = dma.done %s233, 256
        $region44: #{tpu_custom_call.1} parent=35 // pred_fallthru
          _
        // Predicated region
        $region45: #{tpu_custom_call.1} parent=35 // pred_check
          %p241 = pneg %p92
        $region46: #{tpu_custom_call.1} parent=35 // pred_check_branch
          %243 = sbr.rel (%p241) target = $region48
        $region47: #{tpu_custom_call.1} parent=35 // pred_region
          %244 = dma.done [#allocation6], 1024
        $region48: #{tpu_custom_call.1} parent=35 // pred_fallthru
          _
        %s245 = sand.u32 %s32, 1
        %s246 = scalar_lea.sflag [#allocation3], %s245
        %s247 = sand.u32 %s32, 1
        %s248 = smul.addr %s247, 16
        %s249 = scalar_lea.vmem [#allocation2], %s248
        %p250 = pneg %p45
        %p251 = pneg %p42
        %s252 = sand.u32 %s24, 1
        %s253 = scalar_lea.sflag [#allocation6], %s252
        %s254 = sand.u32 %s58, 1
        %s255 = smul.addr %s254, 16
        %s256 = scalar_lea.vmem [#allocation5], %s255
        %p257 = pneg %p71
        %p258 = pneg %p68
        %p259 = pneg %p92
        %p260 = pneg %p89
        %p261 = pneg %p113
        %p262 = pneg %p110
        %p263 = pneg %p139
        %p264 = pneg %p136
        %s265 = sand.u32 %s126, 1
        %s266 = scalar_lea.sflag [#allocation4], %s265
        %s267 = sand.u32 %s126, 1
        %s268 = smul.addr %s267, 32
        %s269 = scalar_lea.vmem [#allocation8], %s268
        %s270 = smul.u32 4, %s24
        %s271 = smul.u32 4, %s24
        %s272 = smul.u32 4, %s24
        %v274 = vld [vmem:[%s227] sm:$0xf]
        %v275 = vld [vmem:[%s227 + $0x4] sm:$0xf]
        %v276 = vld [vmem:[%s227 + $0x8] sm:$0xf]
        %v277 = vld [vmem:[%s227 + $0xc] sm:$0xf]
        %v278 = vld [vmem:[#allocation7] sm:$0xf]
        %v279 = vld [vmem:[#allocation7 + $0x4] sm:$0xf]
        %v280 = vld [vmem:[#allocation7 + $0x8] sm:$0xf]
        %v281 = vld [vmem:[#allocation7 + $0xc] sm:$0xf]
        %v282 = vld [vmem:[#allocation7 + $0x10] sm:$0xf]
        %v283 = vld [vmem:[#allocation7 + $0x14] sm:$0xf]
        %v284 = vld [vmem:[#allocation7 + $0x18] sm:$0xf]
        %v285 = vld [vmem:[#allocation7 + $0x1c] sm:$0xf]
        %v286 = vld [vmem:[#allocation7 + $0x20] sm:$0xf]
        %v287 = vld [vmem:[#allocation7 + $0x24] sm:$0xf]
        %v288 = vld [vmem:[#allocation7 + $0x28] sm:$0xf]
        %v289 = vld [vmem:[#allocation7 + $0x2c] sm:$0xf]
        %v290 = vld [vmem:[#allocation7 + $0x30] sm:$0xf]
        %v291 = vld [vmem:[#allocation7 + $0x34] sm:$0xf]
        %v292 = vld [vmem:[#allocation7 + $0x38] sm:$0xf]
        %v293 = vld [vmem:[#allocation7 + $0x3c] sm:$0xf]
        %v298 = vunpack.c.l.b16 %v274
        %v299 = vunpack.c.l.b16 %v275
        %v300 = vunpack.c.l.b16 %v276
        %v301 = vunpack.c.l.b16 %v277
        %v302 = vpack.c.b16 %v299, %v298
        %v303 = vpack.c.b16 %v301, %v300
        %v322 = vunpack.c.l.b16 %v278
        %v323 = vunpack.c.l.b16 %v279
        %v324 = vunpack.c.l.b16 %v280
        %v325 = vunpack.c.l.b16 %v281
        %v326 = vunpack.c.l.b16 %v282
        %v327 = vunpack.c.l.b16 %v283
        %v328 = vunpack.c.l.b16 %v284
        %v329 = vunpack.c.l.b16 %v285
        %v330 = vunpack.c.l.b16 %v286
        %v331 = vunpack.c.l.b16 %v287
        %v332 = vunpack.c.l.b16 %v288
        %v333 = vunpack.c.l.b16 %v289
        %v334 = vunpack.c.l.b16 %v290
        %v335 = vunpack.c.l.b16 %v291
        %v336 = vunpack.c.l.b16 %v292
        %v337 = vunpack.c.l.b16 %v293
        %v338 = vpack.c.b16 %v323, %v322
        %v339 = vpack.c.b16 %v325, %v324
        %v340 = vpack.c.b16 %v327, %v326
        %v341 = vpack.c.b16 %v329, %v328
        %v342 = vpack.c.b16 %v331, %v330
        %v343 = vpack.c.b16 %v333, %v332
        %v344 = vpack.c.b16 %v335, %v334
        %v345 = vpack.c.b16 %v337, %v336
        %354 = vmatprep.subr.bf16.mxu0 0
        %355 = vmatpush1.bf16.msra.mxu0 %v338
        %356 = vmatprep.subr.bf16.mxu0 0
        %357 = vmatpush1.bf16.msra.mxu0 %v339
        %358 = vmatprep.subr.bf16.mxu0 0
        %359 = vmatpush1.bf16.msra.mxu0 %v340
        %360 = vmatprep.subr.bf16.mxu0 0
        %361 = vmatpush1.bf16.msra.mxu0 %v341
        %362 = vmatprep.subr.bf16.mxu0 0
        %363 = vmatpush1.bf16.msra.mxu0 %v342
        %364 = vmatprep.subr.bf16.mxu0 0
        %365 = vmatpush1.bf16.msra.mxu0 %v343
        %366 = vmatprep.subr.bf16.mxu0 0
        %367 = vmatpush1.bf16.msra.mxu0 %v344
        %368 = vmatprep.subr.bf16.mxu0 0
        %369 = vmatpush1.bf16.msra.mxu0 %v345
        %370 = vmatprep.subr.bf16.mxu0 0
        %371 = vmatpush1.bf16.msra.mxu0 0
        %372 = vmatprep.subr.bf16.mxu0 0
        %373 = vmatpush1.bf16.msra.mxu0 0
        %374 = vmatprep.subr.bf16.mxu0 0
        %375 = vmatpush1.bf16.msra.mxu0 0
        %376 = vmatprep.subr.bf16.mxu0 0
        %377 = vmatpush1.bf16.msra.mxu0 0
        %378 = vmatprep.subr.bf16.mxu0 0
        %379 = vmatpush1.bf16.msra.mxu0 0
        %380 = vmatprep.subr.bf16.mxu0 0
        %381 = vmatpush1.bf16.msra.mxu0 0
        %382 = vmatprep.subr.bf16.mxu0 0
        %383 = vmatpush1.bf16.msra.mxu0 0
        %384 = vmatprep.subr.bf16.mxu0 0
        %385 = vmatpush1.bf16.msra.mxu0 0
        %386 = vmatprep.mubr.bf16.mxu0 0
        %387 = vmatmul.mubr.bf16.gmra.mrb[0].mxu0 %v302
        %v388 = vpop.f32.mrb[0].mxu0
        %v389 = vadd.f32 0.0, %v388
        %v390 = vpop.f32.mrb[0].mxu0
        %v391 = vpop.f32.mrb[0].mxu0
        %v392 = vadd.f32 0.0, %v391
        %v393 = vpop.f32.mrb[0].mxu0
        %394 = vmatprep.mubr.bf16.mxu0 0
        %395 = vmatmul.mubr.bf16.gmra.mrb[0].mxu0 %v303
        %v396 = vpop.f32.mrb[0].mxu0
        %v397 = vadd.f32 0.0, %v396
        %v398 = vpop.f32.mrb[0].mxu0
        %v399 = vpop.f32.mrb[0].mxu0
        %v400 = vadd.f32 0.0, %v399
        %v401 = vpop.f32.mrb[0].mxu0
        %402 = vdwg.mxu0
        %v403 = vld [vmem:[%s236] sm:$0xf]
        %v404 = vld [vmem:[%s236 + $0x4] sm:$0xf]
        %v405 = vld [vmem:[%s236 + $0x8] sm:$0xf]
        %v406 = vld [vmem:[%s236 + $0xc] sm:$0xf]
        %v407 = vunpack.c.l.bf16 %v403
        %v408 = vunpack.c.l.bf16 %v404
        %v409 = vunpack.c.l.bf16 %v405
        %v410 = vunpack.c.l.bf16 %v406
        %v411 = vld [vmem:[%s3] sm:$0x1]
        %v413 = vlaneseq
        %v414 = vshrl.u32 %v413, 7
        %v415 = vsub.s32 0, %v414
        %v416 = vrot.slane %v411, %v415
        %v418 = vadd.f32 %v407, %v416
        %v419 = vadd.f32 %v408, %v416
        %v420 = vadd.f32 %v409, %v416
        %v421 = vadd.f32 %v410, %v416
        %v422 = vadd.f32 %v418, %v389
        %v423 = vadd.f32 %v419, %v392
        %v424 = vadd.f32 %v420, %v397
        %v425 = vadd.f32 %v421, %v400
        %v426 = vmax.f32 %v422, 0.0
        %v427 = vmax.f32 %v423, 0.0
        %v428 = vmax.f32 %v424, 0.0
        %v429 = vmax.f32 %v425, 0.0
        %430 = vst [vmem:[%s269] sm:$0xff] %v426
        %431 = vst [vmem:[%s269 + $0x8] sm:$0xff] %v427
        %432 = vst [vmem:[%s269 + $0x10] sm:$0xff] %v428
        %433 = vst [vmem:[%s269 + $0x18] sm:$0xff] %v429
        %s434 = sand.u32 %s126, 1
        %s435 = scalar_lea.sflag [#allocation4], %s434
        %s436 = sand.u32 %s126, 1
        %s437 = smul.addr %s436, 32
        %s438 = scalar_lea.vmem [#allocation8], %s437
        // Predicated region
        $region49: #{tpu_custom_call.1} parent=35 // pred_check
          %p439 = pneg %p136
        $region50: #{tpu_custom_call.1} parent=35 // pred_check_branch
          %441 = sbr.rel (%p439) target = $region52
        $region51: #{tpu_custom_call.1} parent=35 // pred_region
          %s442 = smul.u32 4, %s24
          %s444 = ssub.s32 512, 512
          %445 = vsyncadd %s435, %s444
          %s446 = smul.addr %s442, 128
          %s447 = scalar_lea.hbm %s4, %s446
          %s448 = sshll.u32 %s438, 4
          %s449 = int_to_ptr.vmem [resolvable:$true] %s448
          %454 = dma.vmem_to_hbm [thread:$0]  %s449, 512, %s447, %s435, 128, 128, 8
        $region52: #{tpu_custom_call.1} parent=35 // pred_fallthru
          _
      $region36: #{tpu_custom_call.1} parent=5 // pred_fallthru
        _
      %p455 = scmp.le.s32.totalorder 2, %s19
      // Predicated region
      $region53: #{tpu_custom_call.1} parent=5 // pred_check
        %p456 = pneg %p455
      $region54: #{tpu_custom_call.1} parent=5 // pred_check_branch
        %458 = sbr.rel (%p456) target = $region56
      $region55: #{tpu_custom_call.1} parent=5 // pred_region
        %s459 = ssub.s32 %s19, 2
        // Predicated region
        $region57: #{tpu_custom_call.1} parent=55 // pred_check
          %p460 = pneg %p142
        $region58: #{tpu_custom_call.1} parent=55 // pred_check_branch
          %462 = sbr.rel (%p460) target = $region60
        $region59: #{tpu_custom_call.1} parent=55 // pred_region
          %s463 = sand.u32 %s127, 1
          %s464 = scalar_lea.sflag [#allocation4], %s463
          %s465 = sand.u32 %s127, 1
          %s466 = smul.addr %s465, 32
          %s467 = scalar_lea.vmem [#allocation8], %s466
          %468 = dma.done %s464, 512
        $region60: #{tpu_custom_call.1} parent=55 // pred_fallthru
          _
      $region56: #{tpu_custom_call.1} parent=5 // pred_fallthru
        _
    $region6: #{tpu_custom_call.1} parent=1 // loop_footer
      %s23 = sadd.s32 1, %s19
    $region7: #{tpu_custom_call.1} parent=1 // loop_footer_branch
      %18 = sbr.rel target = $region3
    $region8: #{tpu_custom_call.1} parent=1 // loop_exit
      _
    %469 = vsyncpa [#allocation3], 1
    %s470 = scalar_lea.sflag [#allocation3], 1
    %471 = vsyncpa %s470, 1
    %472 = vsyncpa [#allocation6], 1
    %s473 = scalar_lea.sflag [#allocation6], 1
    %474 = vsyncpa %s473, 1
    %475 = vsyncpa [#allocation4], 1
    %s476 = scalar_lea.sflag [#allocation4], 1
    %477 = vsyncpa %s476, 1

</llo_original>
